<compile_context>
chip_gen: v5e
topology: v5e:2x2
jax: 0.10.0
libtpu: 0.0.40
codegen_flags: <defaults>
</compile_context>

<pallas_src>
import functools

import jax
import jax.numpy as jnp
from jax.experimental import pallas as pl
from jax.experimental.pallas import tpu as pltpu


NEG_SLOPE = 0.01  # PyTorch nn.LeakyReLU default


def _leaky_relu(x):
    return jnp.where(x > 0, x, NEG_SLOPE * x)


def _round_up(x, m):
    return ((x + m - 1) // m) * m


def _make_critic_kernel(compute_dtype):
    def critic_kernel(x_ref,
                      w1_ref, b1_ref,
                      w2_ref, b2_ref,
                      w3_ref, b3_ref,
                      w4_ref, b4_ref,
                      out_ref):
        # x: [state_dim, TILE_B]  (batch on lanes)
        x = x_ref[...]

        # fc1 + LeakyReLU : [64, TILE_B]
        h = jnp.dot(w1_ref[...], x, preferred_element_type=jnp.float32)
        h = _leaky_relu(h + b1_ref[...]).astype(compute_dtype)

        # fc2 + LeakyReLU : [32, TILE_B]
        h = jnp.dot(w2_ref[...], h, preferred_element_type=jnp.float32)
        h = _leaky_relu(h + b2_ref[...]).astype(compute_dtype)

        # fc3 + LeakyReLU : [16, TILE_B]
        h = jnp.dot(w3_ref[...], h, preferred_element_type=jnp.float32)
        h = _leaky_relu(h + b3_ref[...]).astype(compute_dtype)

        # fc4 (no activation) : [1, TILE_B]  (lane-dense output store)
        v = jnp.dot(w4_ref[...], h, preferred_element_type=jnp.float32)
        out_ref[...] = (v + b4_ref[...]).astype(out_ref.dtype)

    return critic_kernel


@functools.partial(jax.jit, static_argnames=("tile_b", "compute_dtype"))
def critic_forward(state, params, *, tile_b=None, compute_dtype=jnp.float32):
    """state: [B, state_dim] f32 -> value: [B, 1] f32.

    params = [(w1,b1),...,(w4,b4)] with w: [out, in], b: [out, 1] (f32).
    """
    (w1, b1), (w2, b2), (w3, b3), (w4, b4) = params
    B, state_dim = state.shape

    # Batch tile: lane-aligned (multiple of 128), capped at 4096 rows
    # (~0.5 MiB/tile f32 with state_dim=32 -> ample headroom vs. v7x VMEM).
    if tile_b is None:
        tile_b = min(4096, _round_up(B, 128))
    assert tile_b % 128 == 0, "tile_b must be a multiple of 128 (lane width)"

    # Batch-on-lanes layout; pad the batch so the grid has no ragged tail tile.
    b_pad = _round_up(B, tile_b)
    x_t = jnp.transpose(state).astype(compute_dtype)        # [state_dim, B]
    if b_pad != B:
        x_t = jnp.pad(x_t, ((0, 0), (0, b_pad - B)))

    ws = [w.astype(compute_dtype) for w in (w1, w2, w3, w4)]  # [out, in]
    bs = [b.astype(jnp.float32) for b in (b1, b2, b3, b4)]    # [out, 1]

    grid = (pl.cdiv(b_pad, tile_b),)

    # Weights/biases: full-array blocks, constant index_map -> VMEM-resident.
    resident = lambda a: pl.BlockSpec(a.shape, lambda i: (0,) * a.ndim)

    out_t = pl.pallas_call(
        _make_critic_kernel(compute_dtype),
        out_shape=jax.ShapeDtypeStruct((1, b_pad), jnp.float32),
        grid=grid,
        in_specs=[
            pl.BlockSpec((state_dim, tile_b), lambda i: (0, i)),  # state stream
            resident(ws[0]), resident(bs[0]),
            resident(ws[1]), resident(bs[1]),
            resident(ws[2]), resident(bs[2]),
            resident(ws[3]), resident(bs[3]),
        ],
        out_specs=pl.BlockSpec((1, tile_b), lambda i: (0, i)),
        compiler_params=pltpu.CompilerParams(
            dimension_semantics=("parallel",)),
    )(x_t, ws[0], bs[0], ws[1], bs[1], ws[2], bs[2], ws[3], bs[3])

    return jnp.transpose(out_t[:, :B])  # [B, 1]


def init_params(key, state_dim):
    """Deterministic PyTorch-Linear-style init (uniform +/- 1/sqrt(fan_in)).

    Weights stored [out_features, in_features] (PyTorch layout),
    biases stored [out_features, 1].
    """
    dims = [(state_dim, 64), (64, 32), (32, 16), (16, 1)]
    params = []
    for (fan_in, fan_out) in dims:
        key, kw, kb = jax.random.split(key, 3)
        bound = 1.0 / jnp.sqrt(jnp.float32(fan_in))
        w = jax.random.uniform(kw, (fan_out, fan_in), jnp.float32, -bound, bound)
        b = jax.random.uniform(kb, (fan_out, 1), jnp.float32, -bound, bound)
        params.append((w, b))
    return params


def reference_forward(state, params):
    """Plain-JAX reference (matches PyTorch x @ W.T + b)."""
    h = state
    for i, (w, b) in enumerate(params):
        h = h @ w.T + b.T
        if i < 3:
            h = _leaky_relu(h)
    return h


if __name__ == "__main__":
    key = jax.random.PRNGKey(0)
    state_dim = 32

    k_params, k_state1, k_state2 = jax.random.split(key, 3)
    params = init_params(k_params, state_dim)

    # Test 1: small batch (single grid tile after padding), f32 compute.
    batch = 8
    state = jax.random.normal(k_state1, (batch, state_dim), jnp.float32)
    out = jax.block_until_ready(critic_forward(state, params))
    ref = reference_forward(state, params)
    assert out.shape == (batch, 1), out.shape
    assert jnp.allclose(out, ref, atol=1e-5, rtol=1e-5), (out, ref)

    # Test 2: multi-tile grid (padded ragged batch) + bf16 matmul path.
    batch2 = 300
    state2 = jax.random.normal(k_state2, (batch2, state_dim), jnp.float32)
    out2_f32 = jax.block_until_ready(
        critic_forward(state2, params, tile_b=128, compute_dtype=jnp.float32))
    out2_bf16 = jax.block_until_ready(
        critic_forward(state2, params, tile_b=128, compute_dtype=jnp.bfloat16))
    ref2 = reference_forward(state2, params)
    assert out2_f32.shape == (batch2, 1)
    assert jnp.allclose(out2_f32, ref2, atol=1e-5, rtol=1e-5)
    assert jnp.allclose(out2_bf16, ref2, atol=2e-2, rtol=2e-2)

    print("KERNEL_OK")
</pallas_src>

<mosaic_0001>
module attributes {stable_mosaic.version = 11 : i64} {
  func.func @critic_kernel(%arg0: i32, %arg1: memref<32x128xf32, #tpu.memory_space<vmem>>, %arg2: memref<64x32xf32, #tpu.memory_space<vmem>>, %arg3: memref<64x1xf32, #tpu.memory_space<vmem>>, %arg4: memref<32x64xf32, #tpu.memory_space<vmem>>, %arg5: memref<32x1xf32, #tpu.memory_space<vmem>>, %arg6: memref<16x32xf32, #tpu.memory_space<vmem>>, %arg7: memref<16x1xf32, #tpu.memory_space<vmem>>, %arg8: memref<1x16xf32, #tpu.memory_space<vmem>>, %arg9: memref<1x1xf32, #tpu.memory_space<vmem>>, %arg10: memref<1x128xf32, #tpu.memory_space<vmem>>) attributes {dimension_semantics = [#tpu.dimension_semantics<parallel>], iteration_bounds = array<i64: 1>, scalar_prefetch = 0 : i64, scratch_operands = 0 : i64, tpu.core_type = #tpu.core_type<tc>, window_params = [{transform_indices = @transform_0, window_bounds = array<i64: 32, 128>}, {pipeline_mode = #tpu.pipeline_mode<synchronous>, transform_indices = @transform_1, window_bounds = array<i64: 64, 32>}, {pipeline_mode = #tpu.pipeline_mode<synchronous>, transform_indices = @transform_2, window_bounds = array<i64: 64, 1>}, {pipeline_mode = #tpu.pipeline_mode<synchronous>, transform_indices = @transform_3, window_bounds = array<i64: 32, 64>}, {pipeline_mode = #tpu.pipeline_mode<synchronous>, transform_indices = @transform_4, window_bounds = array<i64: 32, 1>}, {pipeline_mode = #tpu.pipeline_mode<synchronous>, transform_indices = @transform_5, window_bounds = array<i64: 16, 32>}, {pipeline_mode = #tpu.pipeline_mode<synchronous>, transform_indices = @transform_6, window_bounds = array<i64: 16, 1>}, {pipeline_mode = #tpu.pipeline_mode<synchronous>, transform_indices = @transform_7, window_bounds = array<i64: 1, 16>}, {pipeline_mode = #tpu.pipeline_mode<synchronous>, transform_indices = @transform_8, window_bounds = array<i64: 1, 1>}, {transform_indices = @transform_9, window_bounds = array<i64: 1, 128>}]} {
    %c0 = arith.constant 0 : index
    %c0_0 = arith.constant 0 : index
    %0 = vector.load %arg1[%c0, %c0_0] : memref<32x128xf32, #tpu.memory_space<vmem>>, vector<32x128xf32>
    %c0_1 = arith.constant 0 : index
    %c0_2 = arith.constant 0 : index
    %1 = vector.load %arg2[%c0_1, %c0_2] : memref<64x32xf32, #tpu.memory_space<vmem>>, vector<64x32xf32>
    %cst = arith.constant dense<0.000000e+00> : vector<64x128xf32>
    %2 = tpu.matmul %1, %0, %cst {dimension_numbers = #tpu.dot_dimension_numbers<[1], [0], [0], [1], [0, 0, 1, 1], [], []>} : vector<64x32xf32>, vector<32x128xf32>, vector<64x128xf32> -> vector<64x128xf32>
    %c0_3 = arith.constant 0 : index
    %c0_4 = arith.constant 0 : index
    %3 = vector.load %arg3[%c0_3, %c0_4] : memref<64x1xf32, #tpu.memory_space<vmem>>, vector<64x1xf32>
    %4 = vector.broadcast %3 : vector<64x1xf32> to vector<64x128xf32>
    %5 = arith.addf %2, %4 : vector<64x128xf32>
    %cst_5 = arith.constant 0.000000e+00 : f32
    %6 = vector.broadcast %cst_5 : f32 to vector<64x128xf32>
    %7 = arith.cmpf ogt, %5, %6 : vector<64x128xf32>
    %cst_6 = arith.constant 0.00999999977 : f32
    %8 = vector.broadcast %cst_6 : f32 to vector<64x128xf32>
    %9 = arith.mulf %8, %5 : vector<64x128xf32>
    %10 = arith.select %7, %5, %9 : vector<64x128xi1>, vector<64x128xf32>
    %c0_7 = arith.constant 0 : index
    %c0_8 = arith.constant 0 : index
    %11 = vector.load %arg4[%c0_7, %c0_8] : memref<32x64xf32, #tpu.memory_space<vmem>>, vector<32x64xf32>
    %cst_9 = arith.constant dense<0.000000e+00> : vector<32x128xf32>
    %12 = tpu.matmul %11, %10, %cst_9 {dimension_numbers = #tpu.dot_dimension_numbers<[1], [0], [0], [1], [0, 0, 1, 1], [], []>} : vector<32x64xf32>, vector<64x128xf32>, vector<32x128xf32> -> vector<32x128xf32>
    %c0_10 = arith.constant 0 : index
    %c0_11 = arith.constant 0 : index
    %13 = vector.load %arg5[%c0_10, %c0_11] : memref<32x1xf32, #tpu.memory_space<vmem>>, vector<32x1xf32>
    %14 = vector.broadcast %13 : vector<32x1xf32> to vector<32x128xf32>
    %15 = arith.addf %12, %14 : vector<32x128xf32>
    %cst_12 = arith.constant 0.000000e+00 : f32
    %16 = vector.broadcast %cst_12 : f32 to vector<32x128xf32>
    %17 = arith.cmpf ogt, %15, %16 : vector<32x128xf32>
    %cst_13 = arith.constant 0.00999999977 : f32
    %18 = vector.broadcast %cst_13 : f32 to vector<32x128xf32>
    %19 = arith.mulf %18, %15 : vector<32x128xf32>
    %20 = arith.select %17, %15, %19 : vector<32x128xi1>, vector<32x128xf32>
    %c0_14 = arith.constant 0 : index
    %c0_15 = arith.constant 0 : index
    %21 = vector.load %arg6[%c0_14, %c0_15] : memref<16x32xf32, #tpu.memory_space<vmem>>, vector<16x32xf32>
    %cst_16 = arith.constant dense<0.000000e+00> : vector<16x128xf32>
    %22 = tpu.matmul %21, %20, %cst_16 {dimension_numbers = #tpu.dot_dimension_numbers<[1], [0], [0], [1], [0, 0, 1, 1], [], []>} : vector<16x32xf32>, vector<32x128xf32>, vector<16x128xf32> -> vector<16x128xf32>
    %c0_17 = arith.constant 0 : index
    %c0_18 = arith.constant 0 : index
    %23 = vector.load %arg7[%c0_17, %c0_18] : memref<16x1xf32, #tpu.memory_space<vmem>>, vector<16x1xf32>
    %24 = vector.broadcast %23 : vector<16x1xf32> to vector<16x128xf32>
    %25 = arith.addf %22, %24 : vector<16x128xf32>
    %cst_19 = arith.constant 0.000000e+00 : f32
    %26 = vector.broadcast %cst_19 : f32 to vector<16x128xf32>
    %27 = arith.cmpf ogt, %25, %26 : vector<16x128xf32>
    %cst_20 = arith.constant 0.00999999977 : f32
    %28 = vector.broadcast %cst_20 : f32 to vector<16x128xf32>
    %29 = arith.mulf %28, %25 : vector<16x128xf32>
    %30 = arith.select %27, %25, %29 : vector<16x128xi1>, vector<16x128xf32>
    %c0_21 = arith.constant 0 : index
    %c0_22 = arith.constant 0 : index
    %31 = vector.load %arg8[%c0_21, %c0_22] : memref<1x16xf32, #tpu.memory_space<vmem>>, vector<1x16xf32>
    %cst_23 = arith.constant dense<0.000000e+00> : vector<1x128xf32>
    %32 = tpu.matmul %31, %30, %cst_23 {dimension_numbers = #tpu.dot_dimension_numbers<[1], [0], [0], [1], [0, 0, 1, 1], [], []>} : vector<1x16xf32>, vector<16x128xf32>, vector<1x128xf32> -> vector<1x128xf32>
    %c0_24 = arith.constant 0 : index
    %c0_25 = arith.constant 0 : index
    %33 = vector.load %arg9[%c0_24, %c0_25] : memref<1x1xf32, #tpu.memory_space<vmem>>, vector<1x1xf32>
    %34 = vector.broadcast %33 : vector<1x1xf32> to vector<1x128xf32>
    %35 = arith.addf %32, %34 : vector<1x128xf32>
    %c0_26 = arith.constant 0 : index
    %c0_27 = arith.constant 0 : index
    %36 = vector.load %arg10[%c0_26, %c0_27] : memref<1x128xf32, #tpu.memory_space<vmem>>, vector<1x128xf32>
    tpu.vector_store %arg10[%c0_26, %c0_27], %35 {strides = array<i32>} : memref<1x128xf32, #tpu.memory_space<vmem>>, vector<1x128xf32>,
    return
  }
  func.func @transform_0(%arg0: i32) -> (i32, i32) {
    %c0_i32 = arith.constant 0 : i32
    %c0_i32_0 = arith.constant 0 : i32
    return %c0_i32, %arg0 : i32, i32
  }
  func.func @transform_1(%arg0: i32) -> (i32, i32) {
    %c0_i32 = arith.constant 0 : i32
    %c0_i32_0 = arith.constant 0 : i32
    %c0_i32_1 = arith.constant 0 : i32
    return %c0_i32, %c0_i32_0 : i32, i32
  }
  func.func @transform_2(%arg0: i32) -> (i32, i32) {
    %c0_i32 = arith.constant 0 : i32
    %c0_i32_0 = arith.constant 0 : i32
    %c0_i32_1 = arith.constant 0 : i32
    return %c0_i32, %c0_i32_0 : i32, i32
  }
  func.func @transform_3(%arg0: i32) -> (i32, i32) {
    %c0_i32 = arith.constant 0 : i32
    %c0_i32_0 = arith.constant 0 : i32
    %c0_i32_1 = arith.constant 0 : i32
    return %c0_i32, %c0_i32_0 : i32, i32
  }
  func.func @transform_4(%arg0: i32) -> (i32, i32) {
    %c0_i32 = arith.constant 0 : i32
    %c0_i32_0 = arith.constant 0 : i32
    %c0_i32_1 = arith.constant 0 : i32
    return %c0_i32, %c0_i32_0 : i32, i32
  }
  func.func @transform_5(%arg0: i32) -> (i32, i32) {
    %c0_i32 = arith.constant 0 : i32
    %c0_i32_0 = arith.constant 0 : i32
    %c0_i32_1 = arith.constant 0 : i32
    return %c0_i32, %c0_i32_0 : i32, i32
  }
  func.func @transform_6(%arg0: i32) -> (i32, i32) {
    %c0_i32 = arith.constant 0 : i32
    %c0_i32_0 = arith.constant 0 : i32
    %c0_i32_1 = arith.constant 0 : i32
    return %c0_i32, %c0_i32_0 : i32, i32
  }
  func.func @transform_7(%arg0: i32) -> (i32, i32) {
    %c0_i32 = arith.constant 0 : i32
    %c0_i32_0 = arith.constant 0 : i32
    %c0_i32_1 = arith.constant 0 : i32
    return %c0_i32, %c0_i32_0 : i32, i32
  }
  func.func @transform_8(%arg0: i32) -> (i32, i32) {
    %c0_i32 = arith.constant 0 : i32
    %c0_i32_0 = arith.constant 0 : i32
    %c0_i32_1 = arith.constant 0 : i32
    return %c0_i32, %c0_i32_0 : i32, i32
  }
  func.func @transform_9(%arg0: i32) -> (i32, i32) {
    %c0_i32 = arith.constant 0 : i32
    %c0_i32_0 = arith.constant 0 : i32
    return %c0_i32, %arg0 : i32, i32
  }
}

</mosaic_0001>

<llo_original>
// kernel: critic_forward.1
$region0: #{critic_forward.1}
  #allocation0 [shape = 'u32[]', space=smem, size = 0x4, offset = 0x4, fixed_abs, tag = 'smem constant byte address 0x4 - core index']
  #allocation1 [shape = 'u32[72,128]{1,0:T(1,128)}', space=vmem, size = 0x9000, scoped, tag = 'internal scratch']
  #allocation2 [shape = 'f32[1,1]{1,0:T(1,128)S(1)}', space=vmem, size = 0x200, scoped, tag = 'scoped memory for critic_forward.1']
  %s0 = inlined_call_operand.vmem [shape: f32[32,128], index: 0, kind: input, shape index: {}]
  %s1 = inlined_call_operand.vmem [shape: f32[64,32], index: 1, kind: input, shape index: {}]
  %s2 = inlined_call_operand.vmem [shape: f32[64,1], index: 2, kind: input, shape index: {}]
  %s3 = inlined_call_operand.vmem [shape: f32[32,64], index: 3, kind: input, shape index: {}]
  %s4 = inlined_call_operand.vmem [shape: f32[32,1], index: 4, kind: input, shape index: {}]
  %s5 = inlined_call_operand.vmem [shape: f32[16,32], index: 5, kind: input, shape index: {}]
  %s6 = inlined_call_operand.vmem [shape: f32[16,1], index: 6, kind: input, shape index: {}]
  %s7 = inlined_call_operand.vmem [shape: f32[1,16], index: 7, kind: input, shape index: {}]
  %s8 = inlined_call_operand.<no memory space> [shape: f32[1,1], index: 8, kind: input, shape index: {}]
  %s9 = inlined_call_operand.vmem [shape: f32[1,128], index: 9, kind: output, shape index: {}]
  %s10 = sld [smem:[#allocation0]]
  $region46: #{critic_forward.1} parent=0
    _
  %s12 = ssub.s32 1, %s10
  %s13 = scalar_select 0, %s12, %s10
  %v14 = vstv %s8
  %15 = vst [vmem:[#allocation2] sm:$0x1] %v14
  // Predicated region
  $region2: #{critic_forward.1} parent=0 // pred_check
    _
  $region3: #{critic_forward.1} parent=0 // pred_check_branch
    %17 = sbr.rel (0) target = $region5
  $region4: #{critic_forward.1} parent=0 // pred_region
    _
  $region5: #{critic_forward.1} parent=0 // pred_fallthru
    _
  // Predicated region
  $region6: #{critic_forward.1} parent=0 // pred_check
    _
  $region7: #{critic_forward.1} parent=0 // pred_check_branch
    %19 = sbr.rel (0) target = $region9
  $region8: #{critic_forward.1} parent=0 // pred_region
    _
  $region9: #{critic_forward.1} parent=0 // pred_fallthru
    _
  // Predicated region
  $region10: #{critic_forward.1} parent=0 // pred_check
    _
  $region11: #{critic_forward.1} parent=0 // pred_check_branch
    %21 = sbr.rel (0) target = $region13
  $region12: #{critic_forward.1} parent=0 // pred_region
    _
  $region13: #{critic_forward.1} parent=0 // pred_fallthru
    _
  // Predicated region
  $region14: #{critic_forward.1} parent=0 // pred_check
    _
  $region15: #{critic_forward.1} parent=0 // pred_check_branch
    %23 = sbr.rel (0) target = $region17
  $region16: #{critic_forward.1} parent=0 // pred_region
    _
  $region17: #{critic_forward.1} parent=0 // pred_fallthru
    _
  // Predicated region
  $region18: #{critic_forward.1} parent=0 // pred_check
    _
  $region19: #{critic_forward.1} parent=0 // pred_check_branch
    %25 = sbr.rel (0) target = $region21
  $region20: #{critic_forward.1} parent=0 // pred_region
    _
  $region21: #{critic_forward.1} parent=0 // pred_fallthru
    _
  // Predicated region
  $region22: #{critic_forward.1} parent=0 // pred_check
    _
  $region23: #{critic_forward.1} parent=0 // pred_check_branch
    %27 = sbr.rel (0) target = $region25
  $region24: #{critic_forward.1} parent=0 // pred_region
    _
  $region25: #{critic_forward.1} parent=0 // pred_fallthru
    _
  // Predicated region
  $region26: #{critic_forward.1} parent=0 // pred_check
    _
  $region27: #{critic_forward.1} parent=0 // pred_check_branch
    %29 = sbr.rel (0) target = $region29
  $region28: #{critic_forward.1} parent=0 // pred_region
    _
  $region29: #{critic_forward.1} parent=0 // pred_fallthru
    _
  // Predicated region
  $region30: #{critic_forward.1} parent=0 // pred_check
    _
  $region31: #{critic_forward.1} parent=0 // pred_check_branch
    %31 = sbr.rel (0) target = $region33
  $region32: #{critic_forward.1} parent=0 // pred_region
    _
  $region33: #{critic_forward.1} parent=0 // pred_fallthru
    _
  // Predicated region
  $region34: #{critic_forward.1} parent=0 // pred_check
    _
  $region35: #{critic_forward.1} parent=0 // pred_check_branch
    %33 = sbr.rel (0) target = $region37
  $region36: #{critic_forward.1} parent=0 // pred_region
    _
  $region37: #{critic_forward.1} parent=0 // pred_fallthru
    _
  %v34 = vld [vmem:[%s0] sm:$0xff]
  %v35 = vld [vmem:[%s0 + $0x8] sm:$0xff]
  %v36 = vld [vmem:[%s0 + $0x10] sm:$0xff]
  %v37 = vld [vmem:[%s0 + $0x18] sm:$0xff]
  %v38 = vld [vmem:[%s1] sm:$0xff]
  %v39 = vld [vmem:[%s1 + $0x8] sm:$0xff]
  %v40 = vld [vmem:[%s1 + $0x10] sm:$0xff]
  %v41 = vld [vmem:[%s1 + $0x18] sm:$0xff]
  %v42 = vld [vmem:[%s1 + $0x20] sm:$0xff]
  %v43 = vld [vmem:[%s1 + $0x28] sm:$0xff]
  %v44 = vld [vmem:[%s1 + $0x30] sm:$0xff]
  %v45 = vld [vmem:[%s1 + $0x38] sm:$0xff]
  %v46 = vld [vmem:[%s2] sm:$0xff]
  %v47 = vld [vmem:[%s2 + $0x8] sm:$0xff]
  %v48 = vld [vmem:[%s2 + $0x10] sm:$0xff]
  %v49 = vld [vmem:[%s2 + $0x18] sm:$0xff]
  %v50 = vld [vmem:[%s2 + $0x20] sm:$0xff]
  %v51 = vld [vmem:[%s2 + $0x28] sm:$0xff]
  %v52 = vld [vmem:[%s2 + $0x30] sm:$0xff]
  %v53 = vld [vmem:[%s2 + $0x38] sm:$0xff]
  %55 = vset.pattern.permute.xlu0 0
  %56 = vperm.xlu0 %55, %v46
  %v57 = vpop.permute.xlu0 %56
  %60 = vset.pattern.permute.xlu0 0
  %61 = vperm.xlu0 %60, %v47
  %v62 = vpop.permute.xlu0 %61
  %65 = vset.pattern.permute.xlu0 0
  %66 = vperm.xlu0 %65, %v48
  %v67 = vpop.permute.xlu0 %66
  %70 = vset.pattern.permute.xlu0 0
  %71 = vperm.xlu0 %70, %v49
  %v72 = vpop.permute.xlu0 %71
  %75 = vset.pattern.permute.xlu0 0
  %76 = vperm.xlu0 %75, %v50
  %v77 = vpop.permute.xlu0 %76
  %80 = vset.pattern.permute.xlu0 0
  %81 = vperm.xlu0 %80, %v51
  %v82 = vpop.permute.xlu0 %81
  %85 = vset.pattern.permute.xlu0 0
  %86 = vperm.xlu0 %85, %v52
  %v87 = vpop.permute.xlu0 %86
  %90 = vset.pattern.permute.xlu0 0
  %91 = vperm.xlu0 %90, %v53
  %v92 = vpop.permute.xlu0 %91
  %vm94 = vcmask 261120
  %v96 = vsel %vm94, %v38, 0
  %v99 = vsel %vm94, %v39, 0
  %v102 = vsel %vm94, %v40, 0
  %v105 = vsel %vm94, %v41, 0
  %v108 = vsel %vm94, %v42, 0
  %v111 = vsel %vm94, %v43, 0
  %v114 = vsel %vm94, %v44, 0
  %v117 = vsel %vm94, %v45, 0
  %119 = vmatpush.msra.mxu0 0.0
  %120 = vmatpush.msra.mxu0 0.0
  %121 = vmatpush.msra.mxu0 0.0
  %122 = vmatpush.msra.mxu0 0.0
  %123 = vmatpush.msra.mxu0 0.0
  %124 = vmatpush.msra.mxu0 0.0
  %125 = vmatpush.msra.mxu0 0.0
  %126 = vmatpush.msra.mxu0 0.0
  %127 = vmatpush.msra.mxu0 0.0
  %128 = vmatpush.msra.mxu0 0.0
  %129 = vmatpush.msra.mxu0 0.0
  %130 = vmatpush.msra.mxu0 0.0
  %131 = vmatpush.msra.mxu0 %v37
  %132 = vmatpush.msra.mxu0 %v36
  %133 = vmatpush.msra.mxu0 %v35
  %134 = vmatpush.msra.mxu0 %v34
  %135 = vmatmul.f32.gmra.mxu0 %v96
  %v136 = vpop.f32.mrf.mxu0
  %v137 = vadd.f32 %v57, %v136
  %138 = vmatmul.f32.gmra.mxu0 %v99
  %v139 = vpop.f32.mrf.mxu0
  %v140 = vadd.f32 %v62, %v139
  %141 = vmatmul.f32.gmra.mxu0 %v102
  %v142 = vpop.f32.mrf.mxu0
  %v143 = vadd.f32 %v67, %v142
  %144 = vmatmul.f32.gmra.mxu0 %v105
  %v145 = vpop.f32.mrf.mxu0
  %v146 = vadd.f32 %v72, %v145
  %147 = vmatmul.f32.gmra.mxu0 %v108
  %v148 = vpop.f32.mrf.mxu0
  %v149 = vadd.f32 %v77, %v148
  %150 = vmatmul.f32.gmra.mxu0 %v111
  %v151 = vpop.f32.mrf.mxu0
  %v152 = vadd.f32 %v82, %v151
  %153 = vmatmul.f32.gmra.mxu0 %v114
  %v154 = vpop.f32.mrf.mxu0
  %v155 = vadd.f32 %v87, %v154
  %156 = vmatmul.f32.gmra.mxu0 %v117
  %v157 = vpop.f32.mrf.mxu0
  %v158 = vadd.f32 %v92, %v157
  %159 = vdwg.mxu0
  %vm160 = vcmp.gt.f32.partialorder %v137, 0.0
  %vm161 = vcmp.gt.f32.partialorder %v140, 0.0
  %vm162 = vcmp.gt.f32.partialorder %v143, 0.0
  %vm163 = vcmp.gt.f32.partialorder %v146, 0.0
  %vm164 = vcmp.gt.f32.partialorder %v149, 0.0
  %vm165 = vcmp.gt.f32.partialorder %v152, 0.0
  %vm166 = vcmp.gt.f32.partialorder %v155, 0.0
  %vm167 = vcmp.gt.f32.partialorder %v158, 0.0
  %v168 = vmul.f32 %v137, 0.01
  %v169 = vmul.f32 %v140, 0.01
  %v170 = vmul.f32 %v143, 0.01
  %v171 = vmul.f32 %v146, 0.01
  %v172 = vmul.f32 %v149, 0.01
  %v173 = vmul.f32 %v152, 0.01
  %v174 = vmul.f32 %v155, 0.01
  %v175 = vmul.f32 %v158, 0.01
  %v176 = vsel %vm160, %v137, %v168
  %v177 = vsel %vm161, %v140, %v169
  %v178 = vsel %vm162, %v143, %v170
  %v179 = vsel %vm163, %v146, %v171
  %v180 = vsel %vm164, %v149, %v172
  %v181 = vsel %vm165, %v152, %v173
  %v182 = vsel %vm166, %v155, %v174
  %v183 = vsel %vm167, %v158, %v175
  %v184 = vld [vmem:[%s3] sm:$0xff]
  %v185 = vld [vmem:[%s3 + $0x8] sm:$0xff]
  %v186 = vld [vmem:[%s3 + $0x10] sm:$0xff]
  %v187 = vld [vmem:[%s3 + $0x18] sm:$0xff]
  %v188 = vld [vmem:[%s4] sm:$0xff]
  %v189 = vld [vmem:[%s4 + $0x8] sm:$0xff]
  %v190 = vld [vmem:[%s4 + $0x10] sm:$0xff]
  %v191 = vld [vmem:[%s4 + $0x18] sm:$0xff]
  %193 = vset.pattern.permute.xlu0 0
  %194 = vperm.xlu0 %193, %v188
  %v195 = vpop.permute.xlu0 %194
  %198 = vset.pattern.permute.xlu0 0
  %199 = vperm.xlu0 %198, %v189
  %v200 = vpop.permute.xlu0 %199
  %203 = vset.pattern.permute.xlu0 0
  %204 = vperm.xlu0 %203, %v190
  %v205 = vpop.permute.xlu0 %204
  %208 = vset.pattern.permute.xlu0 0
  %209 = vperm.xlu0 %208, %v191
  %v210 = vpop.permute.xlu0 %209
  %vm212 = vcmask 523264
  %v214 = vsel %vm212, %v184, 0
  %v217 = vsel %vm212, %v185, 0
  %v220 = vsel %vm212, %v186, 0
  %v223 = vsel %vm212, %v187, 0
  %225 = vmatpush.msra.mxu0 0.0
  %226 = vmatpush.msra.mxu0 0.0
  %227 = vmatpush.msra.mxu0 0.0
  %228 = vmatpush.msra.mxu0 0.0
  %229 = vmatpush.msra.mxu0 0.0
  %230 = vmatpush.msra.mxu0 0.0
  %231 = vmatpush.msra.mxu0 0.0
  %232 = vmatpush.msra.mxu0 0.0
  %233 = vmatpush.msra.mxu0 %v183
  %234 = vmatpush.msra.mxu0 %v182
  %235 = vmatpush.msra.mxu0 %v181
  %236 = vmatpush.msra.mxu0 %v180
  %237 = vmatpush.msra.mxu0 %v179
  %238 = vmatpush.msra.mxu0 %v178
  %239 = vmatpush.msra.mxu0 %v177
  %240 = vmatpush.msra.mxu0 %v176
  %241 = vmatmul.f32.gmra.mxu0 %v214
  %v242 = vpop.f32.mrf.mxu0
  %v243 = vadd.f32 %v195, %v242
  %244 = vmatmul.f32.gmra.mxu0 %v217
  %v245 = vpop.f32.mrf.mxu0
  %v246 = vadd.f32 %v200, %v245
  %247 = vmatmul.f32.gmra.mxu0 %v220
  %v248 = vpop.f32.mrf.mxu0
  %v249 = vadd.f32 %v205, %v248
  %250 = vmatmul.f32.gmra.mxu0 %v223
  %v251 = vpop.f32.mrf.mxu0
  %v252 = vadd.f32 %v210, %v251
  %253 = vdwg.mxu0
  %vm254 = vcmp.gt.f32.partialorder %v243, 0.0
  %vm255 = vcmp.gt.f32.partialorder %v246, 0.0
  %vm256 = vcmp.gt.f32.partialorder %v249, 0.0
  %vm257 = vcmp.gt.f32.partialorder %v252, 0.0
  %v258 = vmul.f32 %v243, 0.01
  %v259 = vmul.f32 %v246, 0.01
  %v260 = vmul.f32 %v249, 0.01
  %v261 = vmul.f32 %v252, 0.01
  %v262 = vsel %vm254, %v243, %v258
  %v263 = vsel %vm255, %v246, %v259
  %v264 = vsel %vm256, %v249, %v260
  %v265 = vsel %vm257, %v252, %v261
  %v266 = vld [vmem:[%s5] sm:$0xff]
  %v267 = vld [vmem:[%s5 + $0x8] sm:$0xff]
  %v268 = vld [vmem:[%s6] sm:$0xff]
  %v269 = vld [vmem:[%s6 + $0x8] sm:$0xff]
  %271 = vset.pattern.permute.xlu0 0
  %272 = vperm.xlu0 %271, %v268
  %v273 = vpop.permute.xlu0 %272
  %276 = vset.pattern.permute.xlu0 0
  %277 = vperm.xlu0 %276, %v269
  %v278 = vpop.permute.xlu0 %277
  %v281 = vsel %vm94, %v266, 0
  %v284 = vsel %vm94, %v267, 0
  %286 = vmatpush.msra.mxu0 0.0
  %287 = vmatpush.msra.mxu0 0.0
  %288 = vmatpush.msra.mxu0 0.0
  %289 = vmatpush.msra.mxu0 0.0
  %290 = vmatpush.msra.mxu0 0.0
  %291 = vmatpush.msra.mxu0 0.0
  %292 = vmatpush.msra.mxu0 0.0
  %293 = vmatpush.msra.mxu0 0.0
  %294 = vmatpush.msra.mxu0 0.0
  %295 = vmatpush.msra.mxu0 0.0
  %296 = vmatpush.msra.mxu0 0.0
  %297 = vmatpush.msra.mxu0 0.0
  %298 = vmatpush.msra.mxu0 %v265
  %299 = vmatpush.msra.mxu0 %v264
  %300 = vmatpush.msra.mxu0 %v263
  %301 = vmatpush.msra.mxu0 %v262
  %302 = vmatmul.f32.gmra.mxu0 %v281
  %v303 = vpop.f32.mrf.mxu0
  %v304 = vadd.f32 %v273, %v303
  %305 = vmatmul.f32.gmra.mxu0 %v284
  %v306 = vpop.f32.mrf.mxu0
  %v307 = vadd.f32 %v278, %v306
  %308 = vdwg.mxu0
  %vm309 = vcmp.gt.f32.partialorder %v304, 0.0
  %vm310 = vcmp.gt.f32.partialorder %v307, 0.0
  %v311 = vmul.f32 %v304, 0.01
  %v312 = vmul.f32 %v307, 0.01
  %v313 = vsel %vm309, %v304, %v311
  %v314 = vsel %vm310, %v307, %v312
  %v315 = vld [vmem:[%s7] sm:$0x1]
  %v316 = vld [vmem:[#allocation2] sm:$0x1]
  %318 = vset.pattern.permute.xlu0 0
  %319 = vperm.xlu0 %318, %v316
  %v320 = vpop.permute.xlu0 %319
  %v322 = vperm.slane %v320, 0
  %vm323 = vcmask 130048
  %v325 = vsel %vm323, %v315, 0
  %327 = vmatpush.msra.mxu0 0.0
  %328 = vmatpush.msra.mxu0 0.0
  %329 = vmatpush.msra.mxu0 0.0
  %330 = vmatpush.msra.mxu0 0.0
  %331 = vmatpush.msra.mxu0 0.0
  %332 = vmatpush.msra.mxu0 0.0
  %333 = vmatpush.msra.mxu0 0.0
  %334 = vmatpush.msra.mxu0 0.0
  %335 = vmatpush.msra.mxu0 0.0
  %336 = vmatpush.msra.mxu0 0.0
  %337 = vmatpush.msra.mxu0 0.0
  %338 = vmatpush.msra.mxu0 0.0
  %339 = vmatpush.msra.mxu0 0.0
  %340 = vmatpush.msra.mxu0 0.0
  %341 = vmatpush.msra.mxu0 %v314
  %342 = vmatpush.msra.mxu0 %v313
  %343 = vmatmul.f32.gmra.mxu0 %v325
  %v344 = vpop.f32.mrf.mxu0
  %v345 = vadd.f32 %v322, %v344
  %346 = vdwg.mxu0
  %347 = vst [vmem:[%s9] sm:$0x1] %v345
  // Predicated region
  $region38: #{critic_forward.1} parent=0 // pred_check
    _
  $region39: #{critic_forward.1} parent=0 // pred_check_branch
    %349 = sbr.rel (0) target = $region41
  $region40: #{critic_forward.1} parent=0 // pred_region
    _
  $region41: #{critic_forward.1} parent=0 // pred_fallthru
    _
  // Predicated region
  $region42: #{critic_forward.1} parent=0 // pred_check
    _
  $region43: #{critic_forward.1} parent=0 // pred_check_branch
    %351 = sbr.rel (0) target = $region45
  $region44: #{critic_forward.1} parent=0 // pred_region
    _
  $region45: #{critic_forward.1} parent=0 // pred_fallthru
    _

</llo_original>
